<compile_context>
chip_gen: v6e
topology: v6e:2x2x1
jax: 0.10.0
libtpu: 0.0.40
codegen_flags: <defaults>
</compile_context>

<pallas_src>
import jax
import jax.numpy as jnp
from jax.experimental import pallas as pl
from jax.experimental.pallas import tpu as pltpu


def _upsample_matmul_kernel(x_ref, r_ref, o_ref):
    # x_ref: (rows, g*W)  r_ref: (g*W, g*sh*sw*W)  o_ref: (rows, g*sh*sw*W)
    # In-kernel upcast keeps the input DMA at native width (no-op for f32/bf16);
    # all replication happens on the MXU; single full-block lane-dense store.
    x = x_ref[...].astype(r_ref.dtype)
    o_ref[...] = jnp.dot(
        x, r_ref[...], preferred_element_type=jnp.float32
    ).astype(o_ref.dtype)


def _divisors(n):
    out = set()
    i = 1
    while i * i <= n:
        if n % i == 0:
            out.add(i)
            out.add(n // i)
        i += 1
    return sorted(out)


def _vmem_capacity_bytes():
    """Physical VMEM of the current generation (conservative fallback)."""
    try:
        info = pltpu.get_tpu_info()
        cap = getattr(info, "vmem_capacity_bytes", None)
        if cap:
            return int(cap)
    except Exception:
        pass
    return 64 * 1024 * 1024  # v7x per-core size: safe lower bound everywhere


def _choose_group(m, w, wout, r_itemsize, r_cap_bytes=2 * 1024 * 1024):
    """How many consecutive H rows to fold into the lane axis.

    Picks the smallest divisor g of m = N*C*H such that the output row
    g*sh*sw*W is a multiple of 128 lanes (unmasked full-width stores), then
    optionally grows g so the input row g*W is lane-dense too, as long as the
    replication matrix stays small and enough rows remain to tile.
    """
    divs = _divisors(m)

    def r_bytes(g):
        return (g * w) * (g * wout) * r_itemsize

    g_out = None
    for g in divs:
        if (g * wout) % 128 == 0 and r_bytes(g) <= r_cap_bytes:
            g_out = g
            break
    if g_out is None:
        for g in divs:  # at least reach 128 output lanes
            if g * wout >= 128 and r_bytes(g) <= r_cap_bytes:
                g_out = g
                break
    if g_out is None:
        return 1
    if (g_out * w) % 128 == 0:
        return g_out
    for g in divs:  # smallest multiple of g_out with a lane-dense input row
        if (g % g_out == 0 and g > g_out and (g * w) % 128 == 0
                and r_bytes(g) <= r_cap_bytes and m // g >= 8):
            return g
    return g_out


def _choose_row_tile(m_rows, out_row_bytes, sub, target_bytes, total_out_bytes):
    """Rows per block.

    Prefers exact divisors of m_rows that are multiples of the dtype-aware
    sublane quantum `sub` (8 f32 / 16 bf16,f16 / 32 int8,fp8) with the OUTPUT
    block <= target_bytes; falls back to a divisor within 2x of the target
    before accepting a ragged (masked last block) tiling.  For outputs larger
    than ~1 MiB an even number of grid steps is preferred (v7x: 2 TensorCores
    on the "parallel" grid axis), and a single grid step is never used.
    """
    divs = _divisors(m_rows)
    cands = [d for d in divs if (d % sub == 0 or d == m_rows)]
    fit = [d for d in cands if d * out_row_bytes <= target_bytes]
    big = total_out_bytes > (1 << 20)

    if fit:
        rows = fit[-1]
        if big:
            for d in reversed(fit):
                if (m_rows // d) % 2 == 0 and 2 * d >= rows:
                    rows = d
                    break
    else:
        near = [d for d in cands if d * out_row_bytes <= 2 * target_bytes]
        if near:
            rows = near[0]          # smallest exact divisor within 2x of target
        else:
            rows = min(m_rows,
                       max(sub, (target_bytes // max(1, out_row_bytes)) // sub * sub))

    if big and rows >= m_rows:
        # Never leave a >1 MiB output on a single grid step (idles one TC on v7x).
        split = [d for d in cands if d < m_rows]
        even = [d for d in split if (m_rows // d) % 2 == 0]
        pick = even or split
        if pick:
            rows = pick[-1]
    return rows


def upsample_nearest(x, scale_factor=2):
    """Equivalent of Upsample(scale_factor=s, mode='nearest')(x) for NCHW x."""
    if x.ndim != 4:
        # TODO(synk): 5-D NCDHW inputs (3-D nearest upsample) not implemented.
        raise NotImplementedError("only 4-D NCHW inputs are supported")

    if isinstance(scale_factor, (tuple, list)):
        sf = tuple(float(s) for s in scale_factor)
        if len(sf) != 2:
            raise NotImplementedError("scale_factor must have 2 entries for NCHW")
    else:
        sf = (float(scale_factor), float(scale_factor))
    if any(s != int(s) or s < 1 for s in sf):
        # TODO(synk): non-integer scales need the general floor(dst/scale) gather.
        raise NotImplementedError("only integer scale factors >= 1 are supported")
    sh, sw = int(sf[0]), int(sf[1])
    if sh == 1 and sw == 1:
        return x

    n, c, h, w = x.shape
    out_h, out_w = h * sh, w * sw
    dt = x.dtype

    if not (jnp.issubdtype(dt, jnp.floating) and dt.itemsize <= 4):
        # TODO(synk): integer / bool / f64 inputs take a plain-XLA replication
        # path (an f32 MXU pass would round integer values with |v| > 2**24).
        return jnp.repeat(jnp.repeat(x, sh, axis=2), sw, axis=3)

    m = n * c * h                 # batch, channels and H folded into the row dim
    wout = sh * sw * w            # per-source-row output width (sh copies of sw-expanded row)
    cdtype = dt if (dt == jnp.float32 or dt == jnp.bfloat16) else jnp.float32
    r_itemsize = jnp.dtype(cdtype).itemsize

    if w * wout * r_itemsize > 4 * 1024 * 1024:
        # TODO(synk): very wide W needs a W-chunked replication matmul so the
        # O(W^2) replication matrix does not blow VMEM; plain XLA path for now.
        return jnp.repeat(jnp.repeat(x, sh, axis=2), sw, axis=3)

    # --- fold g rows into the lane axis so the output row is lane-dense ------
    g = _choose_group(m, w, wout, r_itemsize)
    m2 = m // g
    gw, gwout = g * w, g * wout

    # Static 0/1 block-diagonal replication matrix:
    #   R[v, k] = 1  iff  v == (k // wout) * w + ((k % wout) % out_w) // sw
    col = jnp.arange(gwout, dtype=jnp.int32)
    src = (col // wout) * w + ((col % wout) % out_w) // sw
    rp = (jnp.arange(gw, dtype=jnp.int32)[:, None] == src[None, :]).astype(cdtype)

    x2 = x.reshape(m2, gw)        # free row-major reshape, stays in the native dtype

    # --- generation-aware tiling ---------------------------------------------
    in_item = dt.itemsize
    sub = max(8, 32 // in_item)   # sublane quantum: 8 f32 / 16 bf16,f16 / 32 fp8
    out_row_bytes = gwout * in_item
    cap = _vmem_capacity_bytes()
    target_bytes = 8 * 1024 * 1024 if cap >= 96 * 1024 * 1024 else 4 * 1024 * 1024
    rows = _choose_row_tile(m2, out_row_bytes, sub, target_bytes, m2 * out_row_bytes)
    num_blocks = pl.cdiv(m2, rows)

    # vmem_limit sized from the real footprint: double-buffered in/out blocks
    # plus the (constant-index, DMA'd-once) R block, with headroom.
    in_blk = rows * gw * in_item
    out_blk = rows * gwout * in_item
    r_blk = gw * gwout * r_itemsize
    footprint = 2 * (in_blk + out_blk) + 2 * r_blk + (1 << 20)
    vmem_limit = max(footprint * 3 // 2, 32 * 1024 * 1024)
    vmem_limit = min(vmem_limit, max(cap - 8 * 1024 * 1024, footprint + (1 << 20)))

    y2 = pl.pallas_call(
        _upsample_matmul_kernel,
        out_shape=jax.ShapeDtypeStruct((m2, gwout), dt),
        grid=(num_blocks,),
        in_specs=[
            pl.BlockSpec((rows, gw), lambda i: (i, 0)),
            pl.BlockSpec((gw, gwout), lambda i: (0, 0)),   # constant block: DMA'd once
        ],
        out_specs=pl.BlockSpec((rows, gwout), lambda i: (i, 0)),
        compiler_params=pltpu.CompilerParams(
            dimension_semantics=("parallel",),
            vmem_limit_bytes=int(vmem_limit),
        ),
        cost_estimate=pl.CostEstimate(
            flops=2 * m2 * gw * gwout,
            transcendentals=0,
            bytes_accessed=(m2 * gw + m2 * gwout) * in_item + gw * gwout * r_itemsize,
        ),
    )(x2, rp)

    # Free row-major reshape: y2 flat index (r, j*wout + dh*out_w + ow) lands at
    # out[n, c, ih*sh + dh, ow] with source row r*g + j == (n, c, ih), which is
    # exactly PyTorch 'nearest': out[.., oh, ow] = x[.., oh//sh, ow//sw].
    return y2.reshape(n, c, out_h, out_w)


# TODO(synk): mode='bilinear'/'bicubic' (with align_corners) and the `size=`
# argument of nn.functional.interpolate are not implemented here.


if __name__ == "__main__":
    key = jax.random.PRNGKey(0)
    # Small NCHW input consistent with the module's forward.
    x = jax.random.normal(key, (2, 4, 16, 16), dtype=jnp.float32)

    # scale_factor=2 (the configuration used in the network)
    out = jax.block_until_ready(upsample_nearest(x, scale_factor=2))
    ref = jnp.repeat(jnp.repeat(x, 2, axis=2), 2, axis=3)
    assert out.shape == (2, 4, 32, 32)
    assert jnp.allclose(out, ref), "mismatch vs nearest-neighbor reference (scale=2)"

    # asymmetric tuple scale_factor
    out2 = jax.block_until_ready(upsample_nearest(x, scale_factor=(1, 2)))
    ref2 = jnp.repeat(x, 2, axis=3)
    assert out2.shape == (2, 4, 16, 32)
    assert jnp.allclose(out2, ref2), "mismatch vs nearest-neighbor reference (scale=(1,2))"

    # bf16 path (native MXU dtype, no host-side upcast pass)
    xb = x.astype(jnp.bfloat16)
    out3 = jax.block_until_ready(upsample_nearest(xb, scale_factor=2))
    ref3 = jnp.repeat(jnp.repeat(xb, 2, axis=2), 2, axis=3)
    assert out3.dtype == jnp.bfloat16 and out3.shape == (2, 4, 32, 32)
    assert jnp.allclose(out3.astype(jnp.float32), ref3.astype(jnp.float32),
                        rtol=1e-2, atol=1e-2), "mismatch vs reference (bf16)"

    print("KERNEL_OK")
</pallas_src>

<mosaic_0001>
module attributes {stable_mosaic.version = 11 : i64} {
  func.func @_upsample_matmul_kernel(%arg0: i32, %arg1: memref<16x128xf32, #tpu.memory_space<vmem>>, %arg2: memref<128x512xf32, #tpu.memory_space<vmem>>, %arg3: memref<16x512xf32, #tpu.memory_space<vmem>>) attributes {dimension_semantics = [#tpu.dimension_semantics<parallel>], iteration_bounds = array<i64: 1>, scalar_prefetch = 0 : i64, scratch_operands = 0 : i64, tpu.core_type = #tpu.core_type<tc>, window_params = [{transform_indices = @transform_0, window_bounds = array<i64: 16, 128>}, {pipeline_mode = #tpu.pipeline_mode<synchronous>, transform_indices = @transform_1, window_bounds = array<i64: 128, 512>}, {transform_indices = @transform_2, window_bounds = array<i64: 16, 512>}]} {
    %c0 = arith.constant 0 : index
    %c0_0 = arith.constant 0 : index
    %0 = vector.load %arg1[%c0, %c0_0] : memref<16x128xf32, #tpu.memory_space<vmem>>, vector<16x128xf32>
    %c0_1 = arith.constant 0 : index
    %c0_2 = arith.constant 0 : index
    %1 = vector.load %arg2[%c0_1, %c0_2] : memref<128x512xf32, #tpu.memory_space<vmem>>, vector<128x512xf32>
    %cst = arith.constant dense<0.000000e+00> : vector<16x512xf32>
    %2 = tpu.matmul %0, %1, %cst {dimension_numbers = #tpu.dot_dimension_numbers<[1], [0], [0], [1], [0, 0, 1, 1], [], []>} : vector<16x128xf32>, vector<128x512xf32>, vector<16x512xf32> -> vector<16x512xf32>
    %c0_3 = arith.constant 0 : index
    %c0_4 = arith.constant 0 : index
    %3 = vector.load %arg3[%c0_3, %c0_4] : memref<16x512xf32, #tpu.memory_space<vmem>>, vector<16x512xf32>
    tpu.vector_store %arg3[%c0_3, %c0_4], %2 {strides = array<i32>} : memref<16x512xf32, #tpu.memory_space<vmem>>, vector<16x512xf32>,
    return
  }
  func.func @transform_0(%arg0: i32) -> (i32, i32) {
    %c0_i32 = arith.constant 0 : i32
    %c0_i32_0 = arith.constant 0 : i32
    return %arg0, %c0_i32 : i32, i32
  }
  func.func @transform_1(%arg0: i32) -> (i32, i32) {
    %c0_i32 = arith.constant 0 : i32
    %c0_i32_0 = arith.constant 0 : i32
    %c0_i32_1 = arith.constant 0 : i32
    return %c0_i32, %c0_i32_0 : i32, i32
  }
  func.func @transform_2(%arg0: i32) -> (i32, i32) {
    %c0_i32 = arith.constant 0 : i32
    %c0_i32_0 = arith.constant 0 : i32
    return %arg0, %c0_i32 : i32, i32
  }
}

</mosaic_0001>

<llo_original>
// kernel: tpu_custom_call.1
$region0: #{tpu_custom_call.1}
  #allocation0 [shape = 'u32[]', space=smem, size = 0x4, offset = 0x4, fixed_abs, tag = 'smem constant byte address 0x4 - core index']
  #allocation1 [shape = 'u32[144,128]{1,0:T(1,128)}', space=vmem, size = 0x12000, scoped, tag = 'internal scratch']
  %s0 = inlined_call_operand.hbm [shape: f32[16,128], index: 0, kind: input, shape index: {}]
  %s1 = inlined_call_operand.hbm [shape: f32[128,512], index: 1, kind: input, shape index: {}]
  %s2 = inlined_call_operand.hbm [shape: f32[16,512], index: 2, kind: output, shape index: {}]
  %s3 = sld [smem:[#allocation0]]
  $region26: #{tpu_custom_call.1} parent=0
    _
  %s5 = ssub.s32 1, %s3
  %s6 = scalar_select 0, %s5, %s3
  $region1: #{tpu_custom_call.1} parent=0
    #allocation2 [shape = 'u8[8192]{0}', space=vmem, size = 0x2000, scoped, tag = 'input window, operand 0, single buffered']
    #allocation3 [shape = 's32[1]{0}', space=sflag, size = 0x4, scoped, tag = 'scoped memory for tpu_custom_call.1']
    #allocation4 [shape = 's32[1]{0}', space=sflag, size = 0x4, scoped, tag = 'scoped memory for tpu_custom_call.1']
    #allocation5 [shape = 'u8[262144]{0}', space=vmem, size = 0x40000, scoped, tag = 'input window, operand 1, single buffered']
    #allocation6 [shape = 's32[1]{0}', space=sflag, size = 0x4, scoped, tag = 'scoped memory for tpu_custom_call.1']
    #allocation7 [shape = 'u8[32768]{0}', space=vmem, size = 0x8000, scoped, tag = 'output window, operand 0, single buffered']
    %7 = vsyncpa [#allocation3], 0
    %8 = vsyncpa [#allocation6], 0
    %9 = vsyncpa [#allocation4], 0
    // Predicated region
    $region2: #{tpu_custom_call.1} parent=1 // pred_check
      _
    $region3: #{tpu_custom_call.1} parent=1 // pred_check_branch
      %11 = sbr.rel (0) target = $region5
    $region4: #{tpu_custom_call.1} parent=1 // pred_region
      %s13 = ssub.s32 256, 256
      %14 = vsyncadd [#allocation3], %s13
      %s15 = sshll.u32 [#allocation2], 4
      %s16 = int_to_ptr.vmem [resolvable:$true] %s15
      %21 = dma.hbm_to_vmem [thread:$0]  %s0, 256, %s16, [#allocation3], 128, 128, 8
    $region5: #{tpu_custom_call.1} parent=1 // pred_fallthru
      _
    // Predicated region
    $region6: #{tpu_custom_call.1} parent=1 // pred_check
      _
    $region7: #{tpu_custom_call.1} parent=1 // pred_check_branch
      %23 = sbr.rel (0) target = $region9
    $region8: #{tpu_custom_call.1} parent=1 // pred_region
      %s25 = ssub.s32 8192, 8192
      %26 = vsyncadd [#allocation6], %s25
      %s27 = sshll.u32 [#allocation5], 4
      %s28 = int_to_ptr.vmem [resolvable:$true] %s27
      %33 = dma.hbm_to_vmem [thread:$0]  %s1, 8192, %s28, [#allocation6], 512, 512, 32
    $region9: #{tpu_custom_call.1} parent=1 // pred_fallthru
      _
    // Predicated region
    $region10: #{tpu_custom_call.1} parent=1 // pred_check
      _
    $region11: #{tpu_custom_call.1} parent=1 // pred_check_branch
      %35 = sbr.rel (0) target = $region13
    $region12: #{tpu_custom_call.1} parent=1 // pred_region
      %36 = dma.done [#allocation3], 256
    $region13: #{tpu_custom_call.1} parent=1 // pred_fallthru
      _
    // Predicated region
    $region14: #{tpu_custom_call.1} parent=1 // pred_check
      _
    $region15: #{tpu_custom_call.1} parent=1 // pred_check_branch
      %38 = sbr.rel (0) target = $region17
    $region16: #{tpu_custom_call.1} parent=1 // pred_region
      %39 = dma.done [#allocation6], 8192
    $region17: #{tpu_custom_call.1} parent=1 // pred_fallthru
      _
    %v40 = vld [vmem:[#allocation2] sm:$0xff]
    %v41 = vld [vmem:[#allocation2 + $0x8] sm:$0xff]
    %v42 = vld [vmem:[#allocation5] sm:$0xff]
    %v43 = vld [vmem:[#allocation5 + $0x8] sm:$0xff]
    %v44 = vld [vmem:[#allocation5 + $0x10] sm:$0xff]
    %v45 = vld [vmem:[#allocation5 + $0x18] sm:$0xff]
    %v46 = vld [vmem:[#allocation5 + $0x20] sm:$0xff]
    %v47 = vld [vmem:[#allocation5 + $0x28] sm:$0xff]
    %v48 = vld [vmem:[#allocation5 + $0x30] sm:$0xff]
    %v49 = vld [vmem:[#allocation5 + $0x38] sm:$0xff]
    %v50 = vld [vmem:[#allocation5 + $0x40] sm:$0xff]
    %v51 = vld [vmem:[#allocation5 + $0x48] sm:$0xff]
    %v52 = vld [vmem:[#allocation5 + $0x50] sm:$0xff]
    %v53 = vld [vmem:[#allocation5 + $0x58] sm:$0xff]
    %v54 = vld [vmem:[#allocation5 + $0x60] sm:$0xff]
    %v55 = vld [vmem:[#allocation5 + $0x68] sm:$0xff]
    %v56 = vld [vmem:[#allocation5 + $0x70] sm:$0xff]
    %v57 = vld [vmem:[#allocation5 + $0x78] sm:$0xff]
    %v58 = vld [vmem:[#allocation5 + $0x80] sm:$0xff]
    %v59 = vld [vmem:[#allocation5 + $0x88] sm:$0xff]
    %v60 = vld [vmem:[#allocation5 + $0x90] sm:$0xff]
    %v61 = vld [vmem:[#allocation5 + $0x98] sm:$0xff]
    %v62 = vld [vmem:[#allocation5 + $0xa0] sm:$0xff]
    %v63 = vld [vmem:[#allocation5 + $0xa8] sm:$0xff]
    %v64 = vld [vmem:[#allocation5 + $0xb0] sm:$0xff]
    %v65 = vld [vmem:[#allocation5 + $0xb8] sm:$0xff]
    %v66 = vld [vmem:[#allocation5 + $0xc0] sm:$0xff]
    %v67 = vld [vmem:[#allocation5 + $0xc8] sm:$0xff]
    %v68 = vld [vmem:[#allocation5 + $0xd0] sm:$0xff]
    %v69 = vld [vmem:[#allocation5 + $0xd8] sm:$0xff]
    %v70 = vld [vmem:[#allocation5 + $0xe0] sm:$0xff]
    %v71 = vld [vmem:[#allocation5 + $0xe8] sm:$0xff]
    %v72 = vld [vmem:[#allocation5 + $0xf0] sm:$0xff]
    %v73 = vld [vmem:[#allocation5 + $0xf8] sm:$0xff]
    %v74 = vld [vmem:[#allocation5 + $0x100] sm:$0xff]
    %v75 = vld [vmem:[#allocation5 + $0x108] sm:$0xff]
    %v76 = vld [vmem:[#allocation5 + $0x110] sm:$0xff]
    %v77 = vld [vmem:[#allocation5 + $0x118] sm:$0xff]
    %v78 = vld [vmem:[#allocation5 + $0x120] sm:$0xff]
    %v79 = vld [vmem:[#allocation5 + $0x128] sm:$0xff]
    %v80 = vld [vmem:[#allocation5 + $0x130] sm:$0xff]
    %v81 = vld [vmem:[#allocation5 + $0x138] sm:$0xff]
    %v82 = vld [vmem:[#allocation5 + $0x140] sm:$0xff]
    %v83 = vld [vmem:[#allocation5 + $0x148] sm:$0xff]
    %v84 = vld [vmem:[#allocation5 + $0x150] sm:$0xff]
    %v85 = vld [vmem:[#allocation5 + $0x158] sm:$0xff]
    %v86 = vld [vmem:[#allocation5 + $0x160] sm:$0xff]
    %v87 = vld [vmem:[#allocation5 + $0x168] sm:$0xff]
    %v88 = vld [vmem:[#allocation5 + $0x170] sm:$0xff]
    %v89 = vld [vmem:[#allocation5 + $0x178] sm:$0xff]
    %v90 = vld [vmem:[#allocation5 + $0x180] sm:$0xff]
    %v91 = vld [vmem:[#allocation5 + $0x188] sm:$0xff]
    %v92 = vld [vmem:[#allocation5 + $0x190] sm:$0xff]
    %v93 = vld [vmem:[#allocation5 + $0x198] sm:$0xff]
    %v94 = vld [vmem:[#allocation5 + $0x1a0] sm:$0xff]
    %v95 = vld [vmem:[#allocation5 + $0x1a8] sm:$0xff]
    %v96 = vld [vmem:[#allocation5 + $0x1b0] sm:$0xff]
    %v97 = vld [vmem:[#allocation5 + $0x1b8] sm:$0xff]
    %v98 = vld [vmem:[#allocation5 + $0x1c0] sm:$0xff]
    %v99 = vld [vmem:[#allocation5 + $0x1c8] sm:$0xff]
    %v100 = vld [vmem:[#allocation5 + $0x1d0] sm:$0xff]
    %v101 = vld [vmem:[#allocation5 + $0x1d8] sm:$0xff]
    %v102 = vld [vmem:[#allocation5 + $0x1e0] sm:$0xff]
    %v103 = vld [vmem:[#allocation5 + $0x1e8] sm:$0xff]
    %v104 = vld [vmem:[#allocation5 + $0x1f0] sm:$0xff]
    %v105 = vld [vmem:[#allocation5 + $0x1f8] sm:$0xff]
    %106 = vmatprep.subr.mxu0 %v103
    %107 = vmatpush1.msra.mxu0 %v102
    %108 = vmatprep.subr.mxu0 %v99
    %109 = vmatpush1.msra.mxu0 %v98
    %110 = vmatprep.subr.mxu0 %v95
    %111 = vmatpush1.msra.mxu0 %v94
    %112 = vmatprep.subr.mxu0 %v91
    %113 = vmatpush1.msra.mxu0 %v90
    %114 = vmatprep.subr.mxu0 %v87
    %115 = vmatpush1.msra.mxu0 %v86
    %116 = vmatprep.subr.mxu0 %v83
    %117 = vmatpush1.msra.mxu0 %v82
    %118 = vmatprep.subr.mxu0 %v79
    %119 = vmatpush1.msra.mxu0 %v78
    %120 = vmatprep.subr.mxu0 %v75
    %121 = vmatpush1.msra.mxu0 %v74
    %122 = vmatprep.subr.mxu0 %v71
    %123 = vmatpush1.msra.mxu0 %v70
    %124 = vmatprep.subr.mxu0 %v67
    %125 = vmatpush1.msra.mxu0 %v66
    %126 = vmatprep.subr.mxu0 %v63
    %127 = vmatpush1.msra.mxu0 %v62
    %128 = vmatprep.subr.mxu0 %v59
    %129 = vmatpush1.msra.mxu0 %v58
    %130 = vmatprep.subr.mxu0 %v55
    %131 = vmatpush1.msra.mxu0 %v54
    %132 = vmatprep.subr.mxu0 %v51
    %133 = vmatpush1.msra.mxu0 %v50
    %134 = vmatprep.subr.mxu0 %v47
    %135 = vmatpush1.msra.mxu0 %v46
    %136 = vmatprep.subr.mxu0 %v43
    %137 = vmatpush1.msra.mxu0 %v42
    %138 = vmatprep.subr.mxu0 0.0
    %139 = vmatpush2.msra.mxu0 0.0
    %140 = vmatprep.subr.mxu0 0.0
    %141 = vmatpush2.msra.mxu0 0.0
    %142 = vmatprep.subr.mxu0 0.0
    %143 = vmatpush2.msra.mxu0 0.0
    %144 = vmatprep.subr.mxu0 0.0
    %145 = vmatpush2.msra.mxu0 0.0
    %146 = vmatprep.subr.mxu0 0.0
    %147 = vmatpush2.msra.mxu0 0.0
    %148 = vmatprep.subr.mxu0 0.0
    %149 = vmatpush2.msra.mxu0 0.0
    %150 = vmatprep.subr.mxu0 0.0
    %151 = vmatpush2.msra.mxu0 0.0
    %152 = vmatprep.subr.mxu0 0.0
    %153 = vmatpush2.msra.mxu0 0.0
    %154 = vmatprep.subr.mxu0 0.0
    %155 = vmatpush2.msra.mxu0 0.0
    %156 = vmatprep.subr.mxu0 0.0
    %157 = vmatpush2.msra.mxu0 0.0
    %158 = vmatprep.subr.mxu0 0.0
    %159 = vmatpush2.msra.mxu0 0.0
    %160 = vmatprep.subr.mxu0 0.0
    %161 = vmatpush2.msra.mxu0 0.0
    %162 = vmatprep.subr.mxu0 0.0
    %163 = vmatpush2.msra.mxu0 0.0
    %164 = vmatprep.subr.mxu0 0.0
    %165 = vmatpush2.msra.mxu0 0.0
    %166 = vmatprep.subr.mxu0 0.0
    %167 = vmatpush2.msra.mxu0 0.0
    %168 = vmatprep.subr.mxu0 0.0
    %169 = vmatpush2.msra.mxu0 0.0
    %170 = vmatprep.mubr.f32.mxu0 0.0
    %171 = vmatmul.mubr.f32.gmra.mxu0 %v40
    %v172 = vpop.f32.mrf.mxu0
    %v173 = vadd.f32 0.0, %v172
    %v174 = vpop.f32.mrf.mxu0
    %v175 = vadd.f32 0.0, %v174
    %176 = vmatprep.mubr.f32.mxu0 0.0
    %177 = vmatmul.mubr.f32.gmra.mxu0 %v41
    %v178 = vpop.f32.mrf.mxu0
    %v179 = vadd.f32 0.0, %v178
    %v180 = vpop.f32.mrf.mxu0
    %v181 = vadd.f32 0.0, %v180
    %182 = vdwg.mxu0
    %183 = vmatprep.subr.mxu0 %v105
    %184 = vmatpush1.msra.mxu0 %v104
    %185 = vmatprep.subr.mxu0 %v101
    %186 = vmatpush1.msra.mxu0 %v100
    %187 = vmatprep.subr.mxu0 %v97
    %188 = vmatpush1.msra.mxu0 %v96
    %189 = vmatprep.subr.mxu0 %v93
    %190 = vmatpush1.msra.mxu0 %v92
    %191 = vmatprep.subr.mxu0 %v89
    %192 = vmatpush1.msra.mxu0 %v88
    %193 = vmatprep.subr.mxu0 %v85
    %194 = vmatpush1.msra.mxu0 %v84
    %195 = vmatprep.subr.mxu0 %v81
    %196 = vmatpush1.msra.mxu0 %v80
    %197 = vmatprep.subr.mxu0 %v77
    %198 = vmatpush1.msra.mxu0 %v76
    %199 = vmatprep.subr.mxu0 %v73
    %200 = vmatpush1.msra.mxu0 %v72
    %201 = vmatprep.subr.mxu0 %v69
    %202 = vmatpush1.msra.mxu0 %v68
    %203 = vmatprep.subr.mxu0 %v65
    %204 = vmatpush1.msra.mxu0 %v64
    %205 = vmatprep.subr.mxu0 %v61
    %206 = vmatpush1.msra.mxu0 %v60
    %207 = vmatprep.subr.mxu0 %v57
    %208 = vmatpush1.msra.mxu0 %v56
    %209 = vmatprep.subr.mxu0 %v53
    %210 = vmatpush1.msra.mxu0 %v52
    %211 = vmatprep.subr.mxu0 %v49
    %212 = vmatpush1.msra.mxu0 %v48
    %213 = vmatprep.subr.mxu0 %v45
    %214 = vmatpush1.msra.mxu0 %v44
    %215 = vmatprep.subr.mxu0 0.0
    %216 = vmatpush2.msra.mxu0 0.0
    %217 = vmatprep.subr.mxu0 0.0
    %218 = vmatpush2.msra.mxu0 0.0
    %219 = vmatprep.subr.mxu0 0.0
    %220 = vmatpush2.msra.mxu0 0.0
    %221 = vmatprep.subr.mxu0 0.0
    %222 = vmatpush2.msra.mxu0 0.0
    %223 = vmatprep.subr.mxu0 0.0
    %224 = vmatpush2.msra.mxu0 0.0
    %225 = vmatprep.subr.mxu0 0.0
    %226 = vmatpush2.msra.mxu0 0.0
    %227 = vmatprep.subr.mxu0 0.0
    %228 = vmatpush2.msra.mxu0 0.0
    %229 = vmatprep.subr.mxu0 0.0
    %230 = vmatpush2.msra.mxu0 0.0
    %231 = vmatprep.subr.mxu0 0.0
    %232 = vmatpush2.msra.mxu0 0.0
    %233 = vmatprep.subr.mxu0 0.0
    %234 = vmatpush2.msra.mxu0 0.0
    %235 = vmatprep.subr.mxu0 0.0
    %236 = vmatpush2.msra.mxu0 0.0
    %237 = vmatprep.subr.mxu0 0.0
    %238 = vmatpush2.msra.mxu0 0.0
    %239 = vmatprep.subr.mxu0 0.0
    %240 = vmatpush2.msra.mxu0 0.0
    %241 = vmatprep.subr.mxu0 0.0
    %242 = vmatpush2.msra.mxu0 0.0
    %243 = vmatprep.subr.mxu0 0.0
    %244 = vmatpush2.msra.mxu0 0.0
    %245 = vmatprep.subr.mxu0 0.0
    %246 = vmatpush2.msra.mxu0 0.0
    %247 = vmatprep.mubr.f32.mxu0 0.0
    %248 = vmatmul.mubr.f32.gmra.mxu0 %v40
    %v249 = vpop.f32.mrf.mxu0
    %v250 = vadd.f32 0.0, %v249
    %v251 = vpop.f32.mrf.mxu0
    %v252 = vadd.f32 0.0, %v251
    %253 = vmatprep.mubr.f32.mxu0 0.0
    %254 = vmatmul.mubr.f32.gmra.mxu0 %v41
    %v255 = vpop.f32.mrf.mxu0
    %v256 = vadd.f32 0.0, %v255
    %v257 = vpop.f32.mrf.mxu0
    %v258 = vadd.f32 0.0, %v257
    %259 = vdwg.mxu0
    %260 = vst [vmem:[#allocation7] sm:$0xff] %v173
    %261 = vst [vmem:[#allocation7 + $0x8] sm:$0xff] %v175
    %262 = vst [vmem:[#allocation7 + $0x10] sm:$0xff] %v250
    %263 = vst [vmem:[#allocation7 + $0x18] sm:$0xff] %v252
    %264 = vst [vmem:[#allocation7 + $0x20] sm:$0xff] %v179
    %265 = vst [vmem:[#allocation7 + $0x28] sm:$0xff] %v181
    %266 = vst [vmem:[#allocation7 + $0x30] sm:$0xff] %v256
    %267 = vst [vmem:[#allocation7 + $0x38] sm:$0xff] %v258
    // Predicated region
    $region18: #{tpu_custom_call.1} parent=1 // pred_check
      _
    $region19: #{tpu_custom_call.1} parent=1 // pred_check_branch
      %269 = sbr.rel (0) target = $region21
    $region20: #{tpu_custom_call.1} parent=1 // pred_region
      %s271 = ssub.s32 1024, 1024
      %272 = vsyncadd [#allocation4], %s271
      %s273 = sshll.u32 [#allocation7], 4
      %s274 = int_to_ptr.vmem [resolvable:$true] %s273
      %279 = dma.vmem_to_hbm [thread:$0]  %s274, 1024, %s2, [#allocation4], 512, 512, 32
    $region21: #{tpu_custom_call.1} parent=1 // pred_fallthru
      _
    // Predicated region
    $region22: #{tpu_custom_call.1} parent=1 // pred_check
      _
    $region23: #{tpu_custom_call.1} parent=1 // pred_check_branch
      %281 = sbr.rel (0) target = $region25
    $region24: #{tpu_custom_call.1} parent=1 // pred_region
      %282 = dma.done [#allocation4], 1024
    $region25: #{tpu_custom_call.1} parent=1 // pred_fallthru
      _
    %283 = vsyncpa [#allocation3], 1
    %284 = vsyncpa [#allocation6], 1
    %285 = vsyncpa [#allocation4], 1

</llo_original>
